<compile_context>
chip_gen: v5e
topology: v5e:2x2
jax: 0.10.0
libtpu: 0.0.40
codegen_flags: <defaults>
</compile_context>

<pallas_src>
import jax
import jax.numpy as jnp
from jax.experimental import pallas as pl
from jax.experimental.pallas import tpu as pltpu


def _round_up(n: int, m: int) -> int:
    return ((n + m - 1) // m) * m


def _tpu_defaults():
    """Per-generation (preferred_batch_tile, vmem_limit_bytes)."""
    try:
        kind = jax.devices()[0].device_kind.lower()
    except Exception:  # pragma: no cover - defensive
        kind = ""
    if "v5" in kind or "v6" in kind:
        # 128 MiB physical VMEM: big tiles + generous scoped-VMEM budget.
        return 512, 100 * 1024 * 1024
    if "v7" in kind:
        # 64 MiB physical VMEM, 2 TensorCores: smaller tile, conservative budget.
        return 256, 48 * 1024 * 1024
    # Unknown chip: stay at the typical scoped-VMEM default.
    return 256, 32 * 1024 * 1024


def _batch_tiling(batch: int, preferred_tile: int, min_steps: int = 2):
    """Choose (tile, grid_steps, padded_batch).

    * tile is a multiple of 8 (sublane granularity).
    * grid has >= min_steps steps whenever the batch is large enough to split
      (v7x shards "parallel" grid steps across its 2 TensorCores).
    * small batches get a small tile instead of being padded up to the preferred tile.
    """
    padded = _round_up(batch, 8)
    steps = max(pl.cdiv(padded, preferred_tile), min(min_steps, padded // 8))
    tile = _round_up(pl.cdiv(padded, steps), 8)
    steps = pl.cdiv(padded, tile)
    return tile, steps, tile * steps


def mlp_kernel(x_ref, w1_ref, b1_ref, w2_ref, b2_ref, w3_ref, b3_ref, o_ref):
    # Fuse the f32 -> bf16 cast of the activation tile into operand prep (VPU work
    # hidden under the MXU) instead of a separate XLA pass over x in HBM.
    x = x_ref[...].astype(jnp.bfloat16)

    # Layer 1: bf16 matmul on the MXU, f32 accumulate; f32 bias + ReLU epilogue (VPU).
    h = jnp.dot(x, w1_ref[...], preferred_element_type=jnp.float32)
    h = jnp.maximum(h + b1_ref[...], 0.0)              # b1 is (1, H) f32 -> broadcast

    # Layer 2: cast activations back to bf16 to stay on the fast MXU path.
    h = jnp.dot(h.astype(jnp.bfloat16), w2_ref[...], preferred_element_type=jnp.float32)
    h = jnp.maximum(h + b2_ref[...], 0.0)

    # Layer 3: logits (no activation).
    out = jnp.dot(h.astype(jnp.bfloat16), w3_ref[...], preferred_element_type=jnp.float32)
    o_ref[...] = (out + b3_ref[...]).astype(o_ref.dtype)


def neural_net_forward(x, params, *, out_dtype=jnp.float32):
    """Full MLP forward in a single Pallas kernel.

    x: [batch, input_size] float32
    params: PREPARED params (see prepare_params): bf16 weights [in, out],
            f32 biases [1, out].
    Returns [batch, num_classes] in out_dtype (default float32).
    """
    batch, input_size = x.shape
    hidden = params["w1"].shape[1]
    num_classes = params["w3"].shape[1]
    assert params["w1"].shape[0] == input_size
    assert params["w2"].shape == (hidden, hidden)
    assert params["w3"].shape[0] == hidden

    preferred_tile, vmem_limit = _tpu_defaults()
    tile, grid_steps, b_p = _batch_tiling(batch, preferred_tile)

    # Only the batch dim ever needs padding (feature dims use full-array blocks).
    xp = x if b_p == batch else jnp.pad(x, ((0, b_p - batch), (0, 0)))

    # Whole-array VMEM residency for the (small) weights/biases: one copy, no
    # per-grid-step pipelining / double buffering of constant operands.
    # NOTE: for hidden >= ~2048 w2 stops fitting comfortably in VMEM (esp. v7x's
    # 64 MiB) -- that regime needs a K-tiled grid with a f32 accumulator instead.
    vmem_resident = pl.BlockSpec(memory_space=pltpu.MemorySpace.VMEM)

    out_padded = pl.pallas_call(
        mlp_kernel,
        out_shape=jax.ShapeDtypeStruct((b_p, num_classes), out_dtype),
        grid_spec=pltpu.PrefetchScalarGridSpec(
            num_scalar_prefetch=0,
            grid=(grid_steps,),
            in_specs=[
                # x: one batch tile per grid step (double-buffered by the pipeline),
                # fed as f32 straight from the caller's array.
                pl.BlockSpec((tile, input_size), lambda i: (i, 0)),
                # Weights / biases: single VMEM-resident copies.
                vmem_resident,  # w1 [in, h]  bf16
                vmem_resident,  # b1 [1, h]   f32
                vmem_resident,  # w2 [h, h]   bf16
                vmem_resident,  # b2 [1, h]   f32
                vmem_resident,  # w3 [h, c]   bf16
                vmem_resident,  # b3 [1, c]   f32
            ],
            out_specs=pl.BlockSpec((tile, num_classes), lambda i: (i, 0)),
        ),
        compiler_params=pltpu.CompilerParams(
            dimension_semantics=("parallel",),   # megacore-shard batch tiles on v7x
            vmem_limit_bytes=vmem_limit,
        ),
    )(
        xp,
        params["w1"], params["b1"],
        params["w2"], params["b2"],
        params["w3"], params["b3"],
    )

    return out_padded if b_p == batch else out_padded[:batch]


def init_params(key, input_size, hidden_size, num_classes):
    """Deterministic init mimicking PyTorch nn.Linear (uniform +/- 1/sqrt(fan_in)).

    Weights stored as [in, out] (transposed vs PyTorch's [out, in]) so the kernel
    does x @ W directly. Biases stored as [1, out] (2-D, TPU-friendly). All float32.
    """
    keys = jax.random.split(key, 6)

    def linear(kw, kb, fan_in, fan_out):
        bound = 1.0 / jnp.sqrt(jnp.float32(fan_in))
        w = jax.random.uniform(kw, (fan_in, fan_out), jnp.float32, -bound, bound)
        b = jax.random.uniform(kb, (1, fan_out), jnp.float32, -bound, bound)
        return w, b

    w1, b1 = linear(keys[0], keys[1], input_size, hidden_size)
    w2, b2 = linear(keys[2], keys[3], hidden_size, hidden_size)
    w3, b3 = linear(keys[4], keys[5], hidden_size, num_classes)
    return {"w1": w1, "b1": b1, "w2": w2, "b2": b2, "w3": w3, "b3": b3}


def prepare_params(params):
    """One-time weight preparation (hoisted out of the forward pass):
    bf16 weights for the MXU, f32 biases for the epilogue.
    (On v7x one could further quantize weights to fp8 here for 2x MXU throughput.)
    """
    prepared = {}
    for name in ("w1", "w2", "w3"):
        prepared[name] = params[name].astype(jnp.bfloat16)
    for name in ("b1", "b2", "b3"):
        b = params[name]
        if b.ndim == 1:
            b = b.reshape(1, -1)
        prepared[name] = b.astype(jnp.float32)
    return prepared


def reference_forward(x, params):
    """Pure-JAX reference matching the kernel's mixed precision
    (bf16 operands, f32 accumulation, f32 bias/ReLU epilogue)."""
    w1 = params["w1"].astype(jnp.bfloat16)
    w2 = params["w2"].astype(jnp.bfloat16)
    w3 = params["w3"].astype(jnp.bfloat16)
    h = jnp.dot(x.astype(jnp.bfloat16), w1, preferred_element_type=jnp.float32)
    h = jnp.maximum(h + params["b1"], 0.0)
    h = jnp.dot(h.astype(jnp.bfloat16), w2, preferred_element_type=jnp.float32)
    h = jnp.maximum(h + params["b2"], 0.0)
    out = jnp.dot(h.astype(jnp.bfloat16), w3, preferred_element_type=jnp.float32)
    return out + params["b3"]


if __name__ == "__main__":
    # Small shapes consistent with the intent-classifier MLP.
    batch, input_size, hidden_size, num_classes = 16, 32, 32, 8

    key = jax.random.PRNGKey(0)
    k_x, k_p = jax.random.split(key)

    x = jax.random.normal(k_x, (batch, input_size), dtype=jnp.float32)
    raw_params = init_params(k_p, input_size, hidden_size, num_classes)
    params = prepare_params(raw_params)          # one-time bf16 weight prep

    out = neural_net_forward(x, params)
    out = jax.block_until_ready(out)

    ref = reference_forward(x, raw_params)
    assert out.shape == (batch, num_classes)
    assert jnp.allclose(out, ref, atol=1e-3, rtol=1e-3), "mismatch vs reference"

    print("KERNEL_OK")
</pallas_src>

<mosaic_0001>
module attributes {stable_mosaic.version = 11 : i64} {
  func.func @mlp_kernel(%arg0: i32, %arg1: memref<8x32xf32, #tpu.memory_space<vmem>>, %arg2: memref<32x32xbf16, #tpu.memory_space<vmem>>, %arg3: memref<1x32xf32, #tpu.memory_space<vmem>>, %arg4: memref<32x32xbf16, #tpu.memory_space<vmem>>, %arg5: memref<1x32xf32, #tpu.memory_space<vmem>>, %arg6: memref<32x8xbf16, #tpu.memory_space<vmem>>, %arg7: memref<1x8xf32, #tpu.memory_space<vmem>>, %arg8: memref<8x8xf32, #tpu.memory_space<vmem>>) attributes {dimension_semantics = [#tpu.dimension_semantics<parallel>], iteration_bounds = array<i64: 2>, scalar_prefetch = 0 : i64, scratch_operands = 0 : i64, tpu.core_type = #tpu.core_type<tc>, window_params = [{transform_indices = @transform_0, window_bounds = array<i64: 8, 32>}, {pipeline_mode = #tpu.pipeline_mode<synchronous>, transform_indices = @transform_1, window_bounds = array<i64: 32, 32>}, {pipeline_mode = #tpu.pipeline_mode<synchronous>, transform_indices = @transform_2, window_bounds = array<i64: 1, 32>}, {pipeline_mode = #tpu.pipeline_mode<synchronous>, transform_indices = @transform_3, window_bounds = array<i64: 32, 32>}, {pipeline_mode = #tpu.pipeline_mode<synchronous>, transform_indices = @transform_4, window_bounds = array<i64: 1, 32>}, {pipeline_mode = #tpu.pipeline_mode<synchronous>, transform_indices = @transform_5, window_bounds = array<i64: 32, 8>}, {pipeline_mode = #tpu.pipeline_mode<synchronous>, transform_indices = @transform_6, window_bounds = array<i64: 1, 8>}, {transform_indices = @transform_7, window_bounds = array<i64: 8, 8>}]} {
    %c0 = arith.constant 0 : index
    %c0_0 = arith.constant 0 : index
    %0 = vector.load %arg1[%c0, %c0_0] : memref<8x32xf32, #tpu.memory_space<vmem>>, vector<8x32xf32>
    %1 = arith.truncf %0 : vector<8x32xf32> to vector<8x32xbf16>
    %c0_1 = arith.constant 0 : index
    %c0_2 = arith.constant 0 : index
    %2 = vector.load %arg2[%c0_1, %c0_2] : memref<32x32xbf16, #tpu.memory_space<vmem>>, vector<32x32xbf16>
    %cst = arith.constant dense<0.000000e+00> : vector<8x32xf32>
    %3 = tpu.matmul %1, %2, %cst {dimension_numbers = #tpu.dot_dimension_numbers<[1], [0], [0], [1], [0, 0, 1, 1], [], []>} : vector<8x32xbf16>, vector<32x32xbf16>, vector<8x32xf32> -> vector<8x32xf32>
    %c0_3 = arith.constant 0 : index
    %c0_4 = arith.constant 0 : index
    %4 = vector.load %arg3[%c0_3, %c0_4] : memref<1x32xf32, #tpu.memory_space<vmem>>, vector<1x32xf32>
    %5 = vector.broadcast %4 : vector<1x32xf32> to vector<8x32xf32>
    %6 = arith.addf %3, %5 : vector<8x32xf32>
    %cst_5 = arith.constant 0.000000e+00 : f32
    %7 = vector.broadcast %cst_5 : f32 to vector<8x32xf32>
    %8 = arith.maximumf %6, %7 : vector<8x32xf32>
    %9 = arith.truncf %8 : vector<8x32xf32> to vector<8x32xbf16>
    %c0_6 = arith.constant 0 : index
    %c0_7 = arith.constant 0 : index
    %10 = vector.load %arg4[%c0_6, %c0_7] : memref<32x32xbf16, #tpu.memory_space<vmem>>, vector<32x32xbf16>
    %cst_8 = arith.constant dense<0.000000e+00> : vector<8x32xf32>
    %11 = tpu.matmul %9, %10, %cst_8 {dimension_numbers = #tpu.dot_dimension_numbers<[1], [0], [0], [1], [0, 0, 1, 1], [], []>} : vector<8x32xbf16>, vector<32x32xbf16>, vector<8x32xf32> -> vector<8x32xf32>
    %c0_9 = arith.constant 0 : index
    %c0_10 = arith.constant 0 : index
    %12 = vector.load %arg5[%c0_9, %c0_10] : memref<1x32xf32, #tpu.memory_space<vmem>>, vector<1x32xf32>
    %13 = vector.broadcast %12 : vector<1x32xf32> to vector<8x32xf32>
    %14 = arith.addf %11, %13 : vector<8x32xf32>
    %cst_11 = arith.constant 0.000000e+00 : f32
    %15 = vector.broadcast %cst_11 : f32 to vector<8x32xf32>
    %16 = arith.maximumf %14, %15 : vector<8x32xf32>
    %17 = arith.truncf %16 : vector<8x32xf32> to vector<8x32xbf16>
    %c0_12 = arith.constant 0 : index
    %c0_13 = arith.constant 0 : index
    %18 = vector.load %arg6[%c0_12, %c0_13] : memref<32x8xbf16, #tpu.memory_space<vmem>>, vector<32x8xbf16>
    %cst_14 = arith.constant dense<0.000000e+00> : vector<8x8xf32>
    %19 = tpu.matmul %17, %18, %cst_14 {dimension_numbers = #tpu.dot_dimension_numbers<[1], [0], [0], [1], [0, 0, 1, 1], [], []>} : vector<8x32xbf16>, vector<32x8xbf16>, vector<8x8xf32> -> vector<8x8xf32>
    %c0_15 = arith.constant 0 : index
    %c0_16 = arith.constant 0 : index
    %20 = vector.load %arg7[%c0_15, %c0_16] : memref<1x8xf32, #tpu.memory_space<vmem>>, vector<1x8xf32>
    %21 = vector.broadcast %20 : vector<1x8xf32> to vector<8x8xf32>
    %22 = arith.addf %19, %21 : vector<8x8xf32>
    %c0_17 = arith.constant 0 : index
    %c0_18 = arith.constant 0 : index
    %23 = vector.load %arg8[%c0_17, %c0_18] : memref<8x8xf32, #tpu.memory_space<vmem>>, vector<8x8xf32>
    tpu.vector_store %arg8[%c0_17, %c0_18], %22 {strides = array<i32>} : memref<8x8xf32, #tpu.memory_space<vmem>>, vector<8x8xf32>,
    return
  }
  func.func @transform_0(%arg0: i32) -> (i32, i32) {
    %c0_i32 = arith.constant 0 : i32
    %c0_i32_0 = arith.constant 0 : i32
    return %arg0, %c0_i32 : i32, i32
  }
  func.func @transform_1(%arg0: i32) -> (i32, i32) {
    %c0_i32 = arith.constant 0 : i32
    %c0_i32_0 = arith.constant 0 : i32
    %c0_i32_1 = arith.constant 0 : i32
    return %c0_i32, %c0_i32_0 : i32, i32
  }
  func.func @transform_2(%arg0: i32) -> (i32, i32) {
    %c0_i32 = arith.constant 0 : i32
    %c0_i32_0 = arith.constant 0 : i32
    %c0_i32_1 = arith.constant 0 : i32
    return %c0_i32, %c0_i32_0 : i32, i32
  }
  func.func @transform_3(%arg0: i32) -> (i32, i32) {
    %c0_i32 = arith.constant 0 : i32
    %c0_i32_0 = arith.constant 0 : i32
    %c0_i32_1 = arith.constant 0 : i32
    return %c0_i32, %c0_i32_0 : i32, i32
  }
  func.func @transform_4(%arg0: i32) -> (i32, i32) {
    %c0_i32 = arith.constant 0 : i32
    %c0_i32_0 = arith.constant 0 : i32
    %c0_i32_1 = arith.constant 0 : i32
    return %c0_i32, %c0_i32_0 : i32, i32
  }
  func.func @transform_5(%arg0: i32) -> (i32, i32) {
    %c0_i32 = arith.constant 0 : i32
    %c0_i32_0 = arith.constant 0 : i32
    %c0_i32_1 = arith.constant 0 : i32
    return %c0_i32, %c0_i32_0 : i32, i32
  }
  func.func @transform_6(%arg0: i32) -> (i32, i32) {
    %c0_i32 = arith.constant 0 : i32
    %c0_i32_0 = arith.constant 0 : i32
    %c0_i32_1 = arith.constant 0 : i32
    return %c0_i32, %c0_i32_0 : i32, i32
  }
  func.func @transform_7(%arg0: i32) -> (i32, i32) {
    %c0_i32 = arith.constant 0 : i32
    %c0_i32_0 = arith.constant 0 : i32
    return %arg0, %c0_i32 : i32, i32
  }
}

</mosaic_0001>

<llo_original>
// kernel: tpu_custom_call.1
$region0: #{tpu_custom_call.1}
  #allocation0 [shape = 'u32[]', space=smem, size = 0x4, offset = 0x4, fixed_abs, tag = 'smem constant byte address 0x4 - core index']
  #allocation1 [shape = 'u32[72,128]{1,0:T(1,128)}', space=vmem, size = 0x9000, scoped, tag = 'internal scratch']
  %s0 = inlined_call_operand.vmem [shape: f32[16,32], index: 0, kind: input, shape index: {}]
  %s1 = inlined_call_operand.hbm [shape: bf16[32,32], index: 1, kind: input, shape index: {}]
  %s2 = inlined_call_operand.vmem [shape: f32[1,32], index: 2, kind: input, shape index: {}]
  %s3 = inlined_call_operand.hbm [shape: bf16[32,32], index: 3, kind: input, shape index: {}]
  %s4 = inlined_call_operand.vmem [shape: f32[1,32], index: 4, kind: input, shape index: {}]
  %s5 = inlined_call_operand.vmem [shape: bf16[32,8], index: 5, kind: input, shape index: {}]
  %s6 = inlined_call_operand.vmem [shape: f32[1,8], index: 6, kind: input, shape index: {}]
  %s7 = inlined_call_operand.vmem [shape: f32[16,8], index: 7, kind: output, shape index: {}]
  %s8 = sld [smem:[#allocation0]]
  $region69: #{tpu_custom_call.1} parent=0
    _
  %s10 = ssub.s32 1, %s8
  %s11 = scalar_select 0, %s10, %s8
  $region1: #{tpu_custom_call.1} parent=0
    #allocation2 [shape = 'u8[8192]{0}', space=vmem, size = 0x2000, scoped, tag = 'input window, operand 1, single buffered']
    #allocation3 [shape = 's32[2]{0}', space=sflag, size = 0x8, scoped, tag = 'scoped memory for tpu_custom_call.1']
    #allocation4 [shape = 'u8[8192]{0}', space=vmem, size = 0x2000, scoped, tag = 'input window, operand 3, single buffered']
    #allocation5 [shape = 's32[1]{0}', space=sflag, size = 0x4, scoped, tag = 'scoped memory for tpu_custom_call.1']
    %12 = vsyncpa [#allocation3], 0
    %13 = vsyncpa [#allocation5], 0
    loop: start=0, step=1, limit=4
    $region2: #{tpu_custom_call.1} parent=1 // loop_pre_header
      _
    $region3: #{tpu_custom_call.1} parent=1 // loop_header
      %s15 = sphi 0, %s19
      %p16 = scmp.ge.s32.totalorder %s15, 4
      %s25 = sphi 0, %s27
      %s28 = sphi 0, %s25
      %s29 = sphi 0, %s28
      %s45 = sphi 0, %s29
      %s49 = sphi 0, %s49
      %s51 = sphi 0, %s49
      %s52 = sphi 0, %s51
      %s66 = sphi 0, %s52
      %s70 = sphi 0, %s70
      %s72 = sphi 0, %s70
      %s73 = sphi 0, %s72
      %s87 = sphi 0, %s73
      %s91 = sphi 0, %s91
      %s93 = sphi 0, %s91
      %s94 = sphi 0, %s93
      %s108 = sphi 0, %s94
      %s112 = sphi 0, %s112
      %s114 = sphi 0, %s112
      %s115 = sphi 0, %s114
      %s129 = sphi 0, %s115
      %s133 = sphi 0, %s133
      %s135 = sphi 0, %s133
      %s136 = sphi 0, %s135
      %s150 = sphi 0, %s136
      %s154 = sphi 0, %s154
      %s156 = sphi 0, %s154
      %s157 = sphi 0, %s156
      %s171 = sphi 0, %s157
      %s177 = sphi 0, %s179
      %s180 = sphi 0, %s177
      %s181 = sphi 0, %s180
      %s197 = sphi 0, %s181
    $region4: #{tpu_custom_call.1} parent=1 // loop_header_branch
      %18 = sbr.rel (%p16) target = $region8
    $region5: #{tpu_custom_call.1} parent=1 // loop_body
      %s20 = ssub.s32 %s15, 1
      %s21 = ssub.s32 %s15, 2
      %s22 = sadd.s32 %s15, 1
      %s23 = ssub.s32 %s15, %s22
      %p24 = scmp.eq.s32.totalorder %s23, 0
      %s26 = sadd.s32 %s25, 1
      %s27 = scalar_select %p24, %s25, %s26
      %p30 = pneg %p24
      %p31 = scmp.eq.s32.totalorder %s15, 1
      %p32 = por %p30, %p31
      %p33 = scmp.ne.s32.totalorder %s25, %s28
      %p34 = scmp.eq.s32.totalorder %s15, 0
      %p35 = por %p33, %p34
      %p36 = scmp.ne.s32.totalorder %s25, %s28
      %p37 = scmp.eq.s32.totalorder %s20, 1
      %p38 = por %p36, %p37
      %p39 = scmp.ne.s32.totalorder %s28, %s29
      %p40 = scmp.eq.s32.totalorder %s20, 0
      %p41 = por %p39, %p40
      %p42 = scmp.ne.s32.totalorder %s28, %s29
      %p43 = scmp.eq.s32.totalorder %s21, 1
      %p44 = por %p42, %p43
      %p46 = scmp.ne.s32.totalorder %s29, %s45
      %p47 = scmp.eq.s32.totalorder %s21, 0
      %p48 = por %p46, %p47
      %s50 = sadd.s32 %s49, 1
      %p53 = scmp.eq.s32.totalorder %s15, 1
      %p54 = scmp.ne.s32.totalorder %s49, %s51
      %p55 = scmp.eq.s32.totalorder %s15, 0
      %p56 = por %p54, %p55
      %p57 = scmp.ne.s32.totalorder %s49, %s51
      %p58 = scmp.eq.s32.totalorder %s20, 1
      %p59 = por %p57, %p58
      %p60 = scmp.ne.s32.totalorder %s51, %s52
      %p61 = scmp.eq.s32.totalorder %s20, 0
      %p62 = por %p60, %p61
      %p63 = scmp.ne.s32.totalorder %s51, %s52
      %p64 = scmp.eq.s32.totalorder %s21, 1
      %p65 = por %p63, %p64
      %p67 = scmp.ne.s32.totalorder %s52, %s66
      %p68 = scmp.eq.s32.totalorder %s21, 0
      %p69 = por %p67, %p68
      %s71 = sadd.s32 %s70, 1
      %p74 = scmp.eq.s32.totalorder %s15, 1
      %p75 = scmp.ne.s32.totalorder %s70, %s72
      %p76 = scmp.eq.s32.totalorder %s15, 0
      %p77 = por %p75, %p76
      %p78 = scmp.ne.s32.totalorder %s70, %s72
      %p79 = scmp.eq.s32.totalorder %s20, 1
      %p80 = por %p78, %p79
      %p81 = scmp.ne.s32.totalorder %s72, %s73
      %p82 = scmp.eq.s32.totalorder %s20, 0
      %p83 = por %p81, %p82
      %p84 = scmp.ne.s32.totalorder %s72, %s73
      %p85 = scmp.eq.s32.totalorder %s21, 1
      %p86 = por %p84, %p85
      %p88 = scmp.ne.s32.totalorder %s73, %s87
      %p89 = scmp.eq.s32.totalorder %s21, 0
      %p90 = por %p88, %p89
      %s92 = sadd.s32 %s91, 1
      %p95 = scmp.eq.s32.totalorder %s15, 1
      %p96 = scmp.ne.s32.totalorder %s91, %s93
      %p97 = scmp.eq.s32.totalorder %s15, 0
      %p98 = por %p96, %p97
      %p99 = scmp.ne.s32.totalorder %s91, %s93
      %p100 = scmp.eq.s32.totalorder %s20, 1
      %p101 = por %p99, %p100
      %p102 = scmp.ne.s32.totalorder %s93, %s94
      %p103 = scmp.eq.s32.totalorder %s20, 0
      %p104 = por %p102, %p103
      %p105 = scmp.ne.s32.totalorder %s93, %s94
      %p106 = scmp.eq.s32.totalorder %s21, 1
      %p107 = por %p105, %p106
      %p109 = scmp.ne.s32.totalorder %s94, %s108
      %p110 = scmp.eq.s32.totalorder %s21, 0
      %p111 = por %p109, %p110
      %s113 = sadd.s32 %s112, 1
      %p116 = scmp.eq.s32.totalorder %s15, 1
      %p117 = scmp.ne.s32.totalorder %s112, %s114
      %p118 = scmp.eq.s32.totalorder %s15, 0
      %p119 = por %p117, %p118
      %p120 = scmp.ne.s32.totalorder %s112, %s114
      %p121 = scmp.eq.s32.totalorder %s20, 1
      %p122 = por %p120, %p121
      %p123 = scmp.ne.s32.totalorder %s114, %s115
      %p124 = scmp.eq.s32.totalorder %s20, 0
      %p125 = por %p123, %p124
      %p126 = scmp.ne.s32.totalorder %s114, %s115
      %p127 = scmp.eq.s32.totalorder %s21, 1
      %p128 = por %p126, %p127
      %p130 = scmp.ne.s32.totalorder %s115, %s129
      %p131 = scmp.eq.s32.totalorder %s21, 0
      %p132 = por %p130, %p131
      %s134 = sadd.s32 %s133, 1
      %p137 = scmp.eq.s32.totalorder %s15, 1
      %p138 = scmp.ne.s32.totalorder %s133, %s135
      %p139 = scmp.eq.s32.totalorder %s15, 0
      %p140 = por %p138, %p139
      %p141 = scmp.ne.s32.totalorder %s133, %s135
      %p142 = scmp.eq.s32.totalorder %s20, 1
      %p143 = por %p141, %p142
      %p144 = scmp.ne.s32.totalorder %s135, %s136
      %p145 = scmp.eq.s32.totalorder %s20, 0
      %p146 = por %p144, %p145
      %p147 = scmp.ne.s32.totalorder %s135, %s136
      %p148 = scmp.eq.s32.totalorder %s21, 1
      %p149 = por %p147, %p148
      %p151 = scmp.ne.s32.totalorder %s136, %s150
      %p152 = scmp.eq.s32.totalorder %s21, 0
      %p153 = por %p151, %p152
      %s155 = sadd.s32 %s154, 1
      %p158 = scmp.eq.s32.totalorder %s15, 1
      %p159 = scmp.ne.s32.totalorder %s154, %s156
      %p160 = scmp.eq.s32.totalorder %s15, 0
      %p161 = por %p159, %p160
      %p162 = scmp.ne.s32.totalorder %s154, %s156
      %p163 = scmp.eq.s32.totalorder %s20, 1
      %p164 = por %p162, %p163
      %p165 = scmp.ne.s32.totalorder %s156, %s157
      %p166 = scmp.eq.s32.totalorder %s20, 0
      %p167 = por %p165, %p166
      %p168 = scmp.ne.s32.totalorder %s156, %s157
      %p169 = scmp.eq.s32.totalorder %s21, 1
      %p170 = por %p168, %p169
      %p172 = scmp.ne.s32.totalorder %s157, %s171
      %p173 = scmp.eq.s32.totalorder %s21, 0
      %p174 = por %p172, %p173
      %s175 = ssub.s32 %s15, %s22
      %p176 = scmp.eq.s32.totalorder %s175, 0
      %s178 = sadd.s32 %s177, 1
      %s179 = scalar_select %p176, %s177, %s178
      %p182 = pneg %p176
      %p183 = scmp.eq.s32.totalorder %s15, 1
      %p184 = por %p182, %p183
      %p185 = scmp.ne.s32.totalorder %s177, %s180
      %p186 = scmp.eq.s32.totalorder %s15, 0
      %p187 = por %p185, %p186
      %p188 = scmp.ne.s32.totalorder %s177, %s180
      %p189 = scmp.eq.s32.totalorder %s20, 1
      %p190 = por %p188, %p189
      %p191 = scmp.ne.s32.totalorder %s180, %s181
      %p192 = scmp.eq.s32.totalorder %s20, 0
      %p193 = por %p191, %p192
      %p194 = scmp.ne.s32.totalorder %s180, %s181
      %p195 = scmp.eq.s32.totalorder %s21, 1
      %p196 = por %p194, %p195
      %p198 = scmp.ne.s32.totalorder %s181, %s197
      %p199 = scmp.eq.s32.totalorder %s21, 0
      %p200 = por %p198, %p199
      %p201 = scmp.le.s32.totalorder 1, %s15
      %p202 = scmp.lt.s32.totalorder %s15, 3
      %p203 = pnand %p201, %p202
      %p204 = pneg %p203
      // Predicated region
      $region9: #{tpu_custom_call.1} parent=5 // pred_check
        _
      $region10: #{tpu_custom_call.1} parent=5 // pred_check_branch
        %206 = sbr.rel (%p203) target = $region12
      $region11: #{tpu_custom_call.1} parent=5 // pred_region
        %s207 = ssub.s32 %s15, 1
        // Predicated region
        $region13: #{tpu_custom_call.1} parent=11 // pred_check
          %p208 = pneg %p62
        $region14: #{tpu_custom_call.1} parent=11 // pred_check_branch
          %210 = sbr.rel (%p208) target = $region16
        $region15: #{tpu_custom_call.1} parent=11 // pred_region
          %212 = vsyncadd [#allocation3], 0
          %s213 = sshll.u32 %s1, 4
          %s214 = int_to_ptr.hbm [resolvable:$true] %s213
          %s215 = sshll.u32 [#allocation2], 4
          %s216 = int_to_ptr.vmem [resolvable:$true] %s215
          %221 = dma.hbm_to_vmem [thread:$0]  %s214, 256, %s216, [#allocation3], 64, 64, 4
        $region16: #{tpu_custom_call.1} parent=11 // pred_fallthru
          _
        // Predicated region
        $region17: #{tpu_custom_call.1} parent=11 // pred_check
          %p222 = pneg %p83
        $region18: #{tpu_custom_call.1} parent=11 // pred_check_branch
          %224 = sbr.rel (%p222) target = $region20
        $region19: #{tpu_custom_call.1} parent=11 // pred_region
          _
        $region20: #{tpu_custom_call.1} parent=11 // pred_fallthru
          _
        // Predicated region
        $region21: #{tpu_custom_call.1} parent=11 // pred_check
          %p225 = pneg %p104
        $region22: #{tpu_custom_call.1} parent=11 // pred_check_branch
          %227 = sbr.rel (%p225) target = $region24
        $region23: #{tpu_custom_call.1} parent=11 // pred_region
          %229 = vsyncadd [#allocation5], 0
          %s230 = sshll.u32 %s3, 4
          %s231 = int_to_ptr.hbm [resolvable:$true] %s230
          %s232 = sshll.u32 [#allocation4], 4
          %s233 = int_to_ptr.vmem [resolvable:$true] %s232
          %238 = dma.hbm_to_vmem [thread:$0]  %s231, 256, %s233, [#allocation5], 64, 64, 4
        $region24: #{tpu_custom_call.1} parent=11 // pred_fallthru
          _
        // Predicated region
        $region25: #{tpu_custom_call.1} parent=11 // pred_check
          %p239 = pneg %p125
        $region26: #{tpu_custom_call.1} parent=11 // pred_check_branch
          %241 = sbr.rel (%p239) target = $region28
        $region27: #{tpu_custom_call.1} parent=11 // pred_region
          _
        $region28: #{tpu_custom_call.1} parent=11 // pred_fallthru
          _
        // Predicated region
        $region29: #{tpu_custom_call.1} parent=11 // pred_check
          %p242 = pneg %p146
        $region30: #{tpu_custom_call.1} parent=11 // pred_check_branch
          %244 = sbr.rel (%p242) target = $region32
        $region31: #{tpu_custom_call.1} parent=11 // pred_region
          _
        $region32: #{tpu_custom_call.1} parent=11 // pred_fallthru
          _
        // Predicated region
        $region33: #{tpu_custom_call.1} parent=11 // pred_check
          %p245 = pneg %p167
        $region34: #{tpu_custom_call.1} parent=11 // pred_check_branch
          %247 = sbr.rel (%p245) target = $region36
        $region35: #{tpu_custom_call.1} parent=11 // pred_region
          _
        $region36: #{tpu_custom_call.1} parent=11 // pred_fallthru
          _
      $region12: #{tpu_custom_call.1} parent=5 // pred_fallthru
        _
      %p248 = scmp.lt.s32.totalorder %s15, 2
      // Predicated region
      $region37: #{tpu_custom_call.1} parent=5 // pred_check
        %p249 = pneg %p248
      $region38: #{tpu_custom_call.1} parent=5 // pred_check_branch
        %251 = sbr.rel (%p249) target = $region40
      $region39: #{tpu_custom_call.1} parent=5 // pred_region
        // Predicated region
        $region41: #{tpu_custom_call.1} parent=39 // pred_check
          %p252 = pneg %p35
        $region42: #{tpu_custom_call.1} parent=39 // pred_check_branch
          %254 = sbr.rel (%p252) target = $region44
        $region43: #{tpu_custom_call.1} parent=39 // pred_region
          %p255 = scmp.lt.s32.totalorder %s15, 1
          %s256 = scalar_select %p255, %s15, 1
          %s257 = smul.addr %s256, 8
          %s258 = scalar_lea.vmem %s0, %s257
        $region44: #{tpu_custom_call.1} parent=39 // pred_fallthru
          _
      $region40: #{tpu_custom_call.1} parent=5 // pred_fallthru
        _
      %p259 = scmp.le.s32.totalorder 1, %s15
      %p260 = scmp.lt.s32.totalorder %s15, 3
      %p261 = pnand %p259, %p260
      %p262 = pneg %p261
      // Predicated region
      $region45: #{tpu_custom_call.1} parent=5 // pred_check
        _
      $region46: #{tpu_custom_call.1} parent=5 // pred_check_branch
        %264 = sbr.rel (%p261) target = $region48
      $region47: #{tpu_custom_call.1} parent=5 // pred_region
        %s265 = ssub.s32 %s15, 1
        // Predicated region
        $region49: #{tpu_custom_call.1} parent=47 // pred_check
          %p266 = pneg %p62
        $region50: #{tpu_custom_call.1} parent=47 // pred_check_branch
          %268 = sbr.rel (%p266) target = $region52
        $region51: #{tpu_custom_call.1} parent=47 // pred_region
          %270 = dma.done [#allocation3], 256
        $region52: #{tpu_custom_call.1} parent=47 // pred_fallthru
          _
        // Predicated region
        $region53: #{tpu_custom_call.1} parent=47 // pred_check
          %p271 = pneg %p104
        $region54: #{tpu_custom_call.1} parent=47 // pred_check_branch
          %273 = sbr.rel (%p271) target = $region56
        $region55: #{tpu_custom_call.1} parent=47 // pred_region
          %275 = dma.done [#allocation5], 256
        $region56: #{tpu_custom_call.1} parent=47 // pred_fallthru
          _
        %p276 = scmp.lt.s32.totalorder %s20, 1
        %s277 = scalar_select %p276, %s20, 1
        %s278 = smul.addr %s277, 8
        %s279 = scalar_lea.vmem %s0, %s278
        %p280 = pneg %p41
        %p281 = pneg %p38
        %p282 = pneg %p62
        %p283 = pneg %p59
        %p284 = pneg %p83
        %p285 = pneg %p80
        %p286 = pneg %p104
        %p287 = pneg %p101
        %p288 = pneg %p125
        %p289 = pneg %p122
        %p290 = pneg %p146
        %p291 = pneg %p143
        %p292 = pneg %p167
        %p293 = pneg %p164
        %p294 = pneg %p193
        %p295 = pneg %p190
        %p296 = scmp.lt.s32.totalorder %s20, 1
        %s297 = scalar_select %p296, %s20, 1
        %s298 = smul.addr %s297, 8
        %s299 = scalar_lea.vmem %s7, %s298
        %p300 = scmp.lt.s32.totalorder %s20, 1
        %s301 = scalar_select %p300, %s20, 1
        %s302 = smul.addr %s301, 8
        %s303 = scalar_lea.vmem %s0, %s302
        %p304 = scmp.lt.s32.totalorder %s20, 1
        %s305 = scalar_select %p304, %s20, 1
        %s306 = smul.addr %s305, 8
        %s307 = scalar_lea.vmem %s7, %s306
        %v309 = vld [vmem:[%s303] sm:$0xff]
        %v310 = vpack.c.bf16 %v309, %v309
        %v311 = vld [vmem:[#allocation2] sm:$0xf]
        %v312 = vld [vmem:[#allocation2 + $0x4] sm:$0xf]
        %v313 = vld [vmem:[#allocation2 + $0x8] sm:$0xf]
        %v314 = vld [vmem:[#allocation2 + $0xc] sm:$0xf]
        %v315 = vld [vmem:[%s2] sm:$0x1]
        %v317 = vperm.slane %v315, 0
        %v323 = vunpack.c.l.b16 %v311
        %v324 = vunpack.c.l.b16 %v312
        %v325 = vunpack.c.l.b16 %v313
        %v326 = vunpack.c.l.b16 %v314
        %v327 = vpack.c.b16 %v324, %v323
        %v328 = vpack.c.b16 %v326, %v325
        %vm331 = vcmask 261120
        %v333 = vsel %vm331, %v310, 0
        %335 = vmatpush.bf16.msra.mxu0 0
        %336 = vmatpush.bf16.msra.mxu0 0
        %337 = vmatpush.bf16.msra.mxu0 0
        %338 = vmatpush.bf16.msra.mxu0 0
        %339 = vmatpush.bf16.msra.mxu0 0
        %340 = vmatpush.bf16.msra.mxu0 0
        %341 = vmatpush.bf16.msra.mxu0 %v328
        %342 = vmatpush.bf16.msra.mxu0 %v327
        %343 = vmatmul.bf16.gmra.mxu0 %v333
        %v344 = vpop.f32.mrf.mxu0
        %v345 = vadd.f32 %v317, %v344
        %v346 = vpop.f32.mrf.mxu0
        %347 = vdwg.mxu0
        %v348 = vmax.f32 %v345, 0.0
        %v349 = vpack.c.bf16 %v348, %v348
        %v350 = vld [vmem:[#allocation4] sm:$0xf]
        %v351 = vld [vmem:[#allocation4 + $0x4] sm:$0xf]
        %v352 = vld [vmem:[#allocation4 + $0x8] sm:$0xf]
        %v353 = vld [vmem:[#allocation4 + $0xc] sm:$0xf]
        %v354 = vld [vmem:[%s4] sm:$0x1]
        %v356 = vperm.slane %v354, 0
        %v362 = vunpack.c.l.b16 %v350
        %v363 = vunpack.c.l.b16 %v351
        %v364 = vunpack.c.l.b16 %v352
        %v365 = vunpack.c.l.b16 %v353
        %v366 = vpack.c.b16 %v363, %v362
        %v367 = vpack.c.b16 %v365, %v364
        %v371 = vsel %vm331, %v349, 0
        %373 = vmatpush.bf16.msra.mxu0 0
        %374 = vmatpush.bf16.msra.mxu0 0
        %375 = vmatpush.bf16.msra.mxu0 0
        %376 = vmatpush.bf16.msra.mxu0 0
        %377 = vmatpush.bf16.msra.mxu0 0
        %378 = vmatpush.bf16.msra.mxu0 0
        %379 = vmatpush.bf16.msra.mxu0 %v367
        %380 = vmatpush.bf16.msra.mxu0 %v366
        %381 = vmatmul.bf16.gmra.mxu0 %v371
        %v382 = vpop.f32.mrf.mxu0
        %v383 = vadd.f32 %v356, %v382
        %v384 = vpop.f32.mrf.mxu0
        %385 = vdwg.mxu0
        %v386 = vmax.f32 %v383, 0.0
        %v387 = vpack.c.bf16 %v386, %v386
        %v388 = vld [vmem:[%s5] sm:$0xf]
        %v389 = vld [vmem:[%s5 + $0x4] sm:$0xf]
        %v390 = vld [vmem:[%s5 + $0x8] sm:$0xf]
        %v391 = vld [vmem:[%s5 + $0xc] sm:$0xf]
        %v392 = vld [vmem:[%s6] sm:$0x1]
        %v394 = vperm.slane %v392, 0
        %v400 = vunpack.c.l.b16 %v388
        %v401 = vunpack.c.l.b16 %v389
        %v402 = vunpack.c.l.b16 %v390
        %v403 = vunpack.c.l.b16 %v391
        %v404 = vpack.c.b16 %v401, %v400
        %v405 = vpack.c.b16 %v403, %v402
        %v409 = vsel %vm331, %v387, 0
        %411 = vmatpush.bf16.msra.mxu0 0
        %412 = vmatpush.bf16.msra.mxu0 0
        %413 = vmatpush.bf16.msra.mxu0 0
        %414 = vmatpush.bf16.msra.mxu0 0
        %415 = vmatpush.bf16.msra.mxu0 0
        %416 = vmatpush.bf16.msra.mxu0 0
        %417 = vmatpush.bf16.msra.mxu0 %v405
        %418 = vmatpush.bf16.msra.mxu0 %v404
        %419 = vmatmul.bf16.gmra.mxu0 %v409
        %v420 = vpop.f32.mrf.mxu0
        %v421 = vadd.f32 %v394, %v420
        %v422 = vpop.f32.mrf.mxu0
        %423 = vdwg.mxu0
        %vm424 = vcmask 64512
        %425 = vst.msk [vmem:[%s307] sm:$0xff] %vm424, %v421
        %p426 = scmp.lt.s32.totalorder %s20, 1
        %s427 = scalar_select %p426, %s20, 1
        %s428 = smul.addr %s427, 8
        %s429 = scalar_lea.vmem %s7, %s428
        // Predicated region
        $region57: #{tpu_custom_call.1} parent=47 // pred_check
          %p430 = pneg %p190
        $region58: #{tpu_custom_call.1} parent=47 // pred_check_branch
          %432 = sbr.rel (%p430) target = $region60
        $region59: #{tpu_custom_call.1} parent=47 // pred_region
          _
        $region60: #{tpu_custom_call.1} parent=47 // pred_fallthru
          _
      $region48: #{tpu_custom_call.1} parent=5 // pred_fallthru
        _
      %p433 = scmp.le.s32.totalorder 2, %s15
      // Predicated region
      $region61: #{tpu_custom_call.1} parent=5 // pred_check
        %p434 = pneg %p433
      $region62: #{tpu_custom_call.1} parent=5 // pred_check_branch
        %436 = sbr.rel (%p434) target = $region64
      $region63: #{tpu_custom_call.1} parent=5 // pred_region
        %s437 = ssub.s32 %s15, 2
        // Predicated region
        $region65: #{tpu_custom_call.1} parent=63 // pred_check
          %p438 = pneg %p196
        $region66: #{tpu_custom_call.1} parent=63 // pred_check_branch
          %440 = sbr.rel (%p438) target = $region68
        $region67: #{tpu_custom_call.1} parent=63 // pred_region
          %p441 = scmp.lt.s32.totalorder %s21, 1
          %s442 = scalar_select %p441, %s21, 1
          %s443 = smul.addr %s442, 8
          %s444 = scalar_lea.vmem %s7, %s443
        $region68: #{tpu_custom_call.1} parent=63 // pred_fallthru
          _
      $region64: #{tpu_custom_call.1} parent=5 // pred_fallthru
        _
    $region6: #{tpu_custom_call.1} parent=1 // loop_footer
      %s19 = sadd.s32 1, %s15
    $region7: #{tpu_custom_call.1} parent=1 // loop_footer_branch
      %14 = sbr.rel target = $region3
    $region8: #{tpu_custom_call.1} parent=1 // loop_exit
      _
    %445 = vsyncpa [#allocation3], 1
    %s446 = scalar_lea.sflag [#allocation3], 1
    %447 = vsyncpa %s446, 1
    %448 = vsyncpa [#allocation5], 1

</llo_original>
